<compile_context>
chip_gen: v6e
topology: v6e:2x2x1
jax: 0.10.0
libtpu: 0.0.40
codegen_flags: <defaults>
</compile_context>

<pallas_src>
import jax
import jax.numpy as jnp
from jax.experimental import pallas as pl
from jax.experimental.pallas import tpu as pltpu


def _dot_attention_kernel(rnn_ref, enc_ref, out_ref, acc_ref):
    # rnn_ref: (S_r, TB, Hb) with S_r in {1, S};  enc_ref: (S, TB, Hb)
    # out_ref: (TB, S);  acc_ref: (S, TB) f32 energy accumulator (scratch).
    k = pl.program_id(1)

    @pl.when(k == 0)
    def _init():
        acc_ref[...] = jnp.zeros_like(acc_ref)

    # Partial energy for this H chunk: multiply in the input dtype, upcast the
    # product and accumulate in f32.  The lane-axis (H) reduction is a chain of
    # VALU vreg adds followed by a single in-vreg lane reduce.
    prod = (rnn_ref[...] * enc_ref[...]).astype(jnp.float32)
    acc_ref[...] += jnp.sum(prod, axis=-1)

    @pl.when(k == pl.num_programs(1) - 1)
    def _finalize():
        # Tiny (S, TB) -> (TB, S) transpose so the softmax reduces along the
        # lane axis and the output store is lane-dense over S.
        energy = acc_ref[...].T
        m = jnp.max(energy, axis=-1, keepdims=True)
        p = jnp.exp(energy - m)
        denom = jnp.sum(p, axis=-1, keepdims=True)
        # Exact reciprocal keeps row sums == 1 to ~1e-7 (approx=True would use
        # the idle EUP slot but adds ~1e-3 relative row-sum error).
        out_ref[...] = (p * pl.reciprocal(denom, approx=False)).astype(out_ref.dtype)


def _vmem_budget():
    """Return (vmem_limit_bytes, per-block byte budget) sized for this chip."""
    try:
        cap = int(pltpu.get_tpu_info().vmem_capacity_bytes)
    except Exception:
        cap = 64 * 1024 * 1024  # conservative fallback (v7x has 64 MiB per TC)
    vmem_limit = min((cap * 3) // 4, 100 * 1024 * 1024)
    return vmem_limit, vmem_limit // 2


def _choose_tiles(B, S, S_r, H, in_itemsize, out_itemsize, budget_bytes,
                  block_b=None, block_h=None):
    """Pick (block_b, block_h) so blocks (with 2x buffering and the in-kernel
    f32 intermediates) stay inside `budget_bytes`, while keeping >= 2 grid
    steps over B when possible."""

    def per_b_bytes(bh):
        inputs = 2 * (S + S_r) * bh * in_itemsize   # double-buffered inputs
        prod_f32 = S * bh * 4                       # in-kernel f32 product
        acc = S * 4                                 # f32 energy accumulator row
        out = 2 * S * out_itemsize                  # double-buffered output
        return inputs + prod_f32 + acc + out

    if block_h is None:
        # block_h must be a multiple of 128 that divides H exactly (so no
        # padded garbage enters the reduction), or H itself.
        cands = [H]
        if H % 128 == 0:
            cands += [c for c in (2048, 1024, 512, 256, 128) if c < H and H % c == 0]
        cands = sorted(set(cands), reverse=True)
        block_h = cands[-1]
        for bh in cands:
            if per_b_bytes(bh) * min(8, B) <= budget_bytes:
                block_h = bh
                break

    if block_b is None:
        if B <= 8:
            block_b = B  # block must equal full B or be a multiple of 8
        else:
            cap = max(8, (budget_bytes // per_b_bytes(block_h) // 8) * 8)
            # Keep >= 2 (target 4) grid steps over B: megacore + DMA overlap.
            split = max(8, ((-(-B // 4) + 7) // 8) * 8)
            block_b = min(cap, split)
    return block_b, block_h


def dot_attention(rnn_out, encoder_outputs, *, block_b=None, block_h=None):
    """Pallas equivalent of Attention(method='dot').forward.

    Args:
      rnn_out:          (S, B, H) or (1, B, H) float array (PyTorch layout).
      encoder_outputs:  (S, B, H) float array.
    Returns:
      (B, S) attention weights (softmax over S; rows sum to 1).
    """
    S, B, H = encoder_outputs.shape
    S_r = rnn_out.shape[0]
    if S_r not in (1, S):
        raise ValueError(f"rnn_out seq dim {S_r} not broadcastable to {S}")

    # Broadcast only batch / hidden dims (usually a no-op).  The seq axis of a
    # (1, B, H) rnn_out is deliberately NOT materialized: the kernel broadcasts
    # it from a size-1 block, avoiding S-fold replicated HBM reads.
    rnn_out = jnp.broadcast_to(rnn_out, (S_r, B, H))

    out_dtype = jnp.result_type(rnn_out.dtype, encoder_outputs.dtype)
    in_itemsize = max(jnp.dtype(rnn_out.dtype).itemsize,
                      jnp.dtype(encoder_outputs.dtype).itemsize)

    vmem_limit, budget = _vmem_budget()
    block_b, block_h = _choose_tiles(
        B, S, S_r, H, in_itemsize, jnp.dtype(out_dtype).itemsize, budget,
        block_b=block_b, block_h=block_h)

    if H % block_h != 0 or (block_h != H and block_h % 128 != 0):
        raise ValueError(f"block_h={block_h} must divide H={H} and be a multiple of 128")
    if block_b != B and block_b % 8 != 0:
        raise ValueError(f"block_b={block_b} must be a multiple of 8 or equal B={B}")

    grid = (pl.cdiv(B, block_b), H // block_h)

    return pl.pallas_call(
        _dot_attention_kernel,
        out_shape=jax.ShapeDtypeStruct((B, S), out_dtype),
        grid=grid,
        in_specs=[
            # rnn: size-1 (or full) seq block pinned to block 0 on that axis.
            pl.BlockSpec((S_r, block_b, block_h), lambda i, k: (0, i, k)),
            # encoder_outputs consumed in its native (S, B, H) layout — no
            # standalone HBM transpose before the kernel.
            pl.BlockSpec((S, block_b, block_h), lambda i, k: (0, i, k)),
        ],
        out_specs=pl.BlockSpec((block_b, S), lambda i, k: (i, 0)),
        scratch_shapes=[pltpu.VMEM((S, block_b), jnp.float32)],
        compiler_params=pltpu.CompilerParams(
            # B tiles are independent -> shard across v7x's 2 TCs; the trailing
            # H axis is the accumulator-resident reduction axis.
            dimension_semantics=("parallel", "arbitrary"),
            vmem_limit_bytes=vmem_limit,
        ),
    )(rnn_out, encoder_outputs)


def _reference(rnn_out, encoder_outputs):
    energy = jnp.sum(rnn_out * encoder_outputs, axis=2)  # (S, B)
    return jax.nn.softmax(energy.T, axis=1)              # (B, S)


if __name__ == "__main__":
    key = jax.random.PRNGKey(0)
    k1, k2, k3, k4 = jax.random.split(key, 4)

    # Case 1: typical decoder attention — rnn_out broadcasts over seq.
    S, B, H = 8, 2, 32
    encoder_outputs = jax.random.normal(k2, (S, B, H), dtype=jnp.float32)
    rnn_hidden = jax.random.normal(k1, (1, B, H), dtype=jnp.float32)
    attn = jax.block_until_ready(dot_attention(rnn_hidden, encoder_outputs))
    ref = _reference(rnn_hidden, encoder_outputs)
    assert attn.shape == (B, S), attn.shape
    assert jnp.allclose(attn, ref, atol=1e-5, rtol=1e-5), "mismatch (broadcast case)"
    assert jnp.allclose(jnp.sum(attn, axis=1), 1.0, atol=1e-5), "rows must sum to 1"

    # Case 2: full (S, B, H) rnn_out, non-multiple-of-8 batch (padded tail B
    # block) and a forced H-reduction tile (exercises accumulator + multi-step
    # grid paths) — still small shapes.
    S2, B2, H2 = 128, 10, 256
    enc2 = jax.random.normal(k3, (S2, B2, H2), dtype=jnp.float32)
    rnn2 = jax.random.normal(k4, (S2, B2, H2), dtype=jnp.float32)
    attn2 = jax.block_until_ready(dot_attention(rnn2, enc2, block_h=128))
    ref2 = _reference(rnn2, enc2)
    assert attn2.shape == (B2, S2), attn2.shape
    assert jnp.allclose(attn2, ref2, atol=1e-5, rtol=1e-5), "mismatch (full case)"
    assert jnp.allclose(jnp.sum(attn2, axis=1), 1.0, atol=1e-5), "rows must sum to 1"

    print("KERNEL_OK")
</pallas_src>

<mosaic_0001>
module attributes {stable_mosaic.version = 11 : i64} {
  func.func @_dot_attention_kernel(%arg0: i32, %arg1: i32, %arg2: memref<1x2x32xf32, #tpu.memory_space<vmem>>, %arg3: memref<8x2x32xf32, #tpu.memory_space<vmem>>, %arg4: memref<2x8xf32, #tpu.memory_space<vmem>>, %arg5: memref<8x2xf32, #tpu.memory_space<vmem>>) attributes {dimension_semantics = [#tpu.dimension_semantics<parallel>, #tpu.dimension_semantics<arbitrary>], iteration_bounds = array<i64: 1, 1>, scalar_prefetch = 0 : i64, scratch_operands = 1 : i64, tpu.core_type = #tpu.core_type<tc>, window_params = [{transform_indices = @transform_0, window_bounds = array<i64: 1, 2, 32>}, {transform_indices = @transform_1, window_bounds = array<i64: 8, 2, 32>}, {transform_indices = @transform_2, window_bounds = array<i64: 2, 8>}]} {
    %c0_i32 = arith.constant 0 : i32
    %0 = arith.cmpi eq, %arg1, %c0_i32 : i32
    %1 = arith.extui %0 : i1 to i32
    %c0_i32_0 = arith.constant 0 : i32
    %2 = arith.cmpi ne, %1, %c0_i32_0 : i32
    scf.if %2 {
      %cst_12 = arith.constant 0.000000e+00 : f32
      %14 = vector.broadcast %cst_12 : f32 to vector<8x2xf32>
      %c0_13 = arith.constant 0 : index
      %c0_14 = arith.constant 0 : index
      %15 = vector.load %arg5[%c0_13, %c0_14] : memref<8x2xf32, #tpu.memory_space<vmem>>, vector<8x2xf32>
      tpu.vector_store %arg5[%c0_13, %c0_14], %14 {strides = array<i32>} : memref<8x2xf32, #tpu.memory_space<vmem>>, vector<8x2xf32>,
    } else {
    }
    %c0 = arith.constant 0 : index
    %c0_1 = arith.constant 0 : index
    %c0_2 = arith.constant 0 : index
    %3 = vector.load %arg2[%c0, %c0_1, %c0_2] : memref<1x2x32xf32, #tpu.memory_space<vmem>>, vector<1x2x32xf32>
    %c0_3 = arith.constant 0 : index
    %c0_4 = arith.constant 0 : index
    %c0_5 = arith.constant 0 : index
    %4 = vector.load %arg3[%c0_3, %c0_4, %c0_5] : memref<8x2x32xf32, #tpu.memory_space<vmem>>, vector<8x2x32xf32>
    %5 = vector.broadcast %3 : vector<1x2x32xf32> to vector<8x2x32xf32>
    %6 = arith.mulf %5, %4 : vector<8x2x32xf32>
    %c0_6 = arith.constant 0 : index
    %c0_7 = arith.constant 0 : index
    %7 = vector.load %arg5[%c0_6, %c0_7] : memref<8x2xf32, #tpu.memory_space<vmem>>, vector<8x2xf32>
    %cst = arith.constant dense<0.000000e+00> : vector<8x2xf32>
    %8 = vector.multi_reduction <add>, %6, %cst [2] : vector<8x2x32xf32> to vector<8x2xf32>
    %9 = arith.addf %7, %8 : vector<8x2xf32>
    %c0_8 = arith.constant 0 : index
    %c0_9 = arith.constant 0 : index
    %10 = vector.load %arg5[%c0_8, %c0_9] : memref<8x2xf32, #tpu.memory_space<vmem>>, vector<8x2xf32>
    tpu.vector_store %arg5[%c0_8, %c0_9], %9 {strides = array<i32>} : memref<8x2xf32, #tpu.memory_space<vmem>>, vector<8x2xf32>,
    %c0_i32_10 = arith.constant 0 : i32
    %11 = arith.cmpi eq, %arg1, %c0_i32_10 : i32
    %12 = arith.extui %11 : i1 to i32
    %c0_i32_11 = arith.constant 0 : i32
    %13 = arith.cmpi ne, %12, %c0_i32_11 : i32
    scf.if %13 {
      %c0_12 = arith.constant 0 : index
      %c0_13 = arith.constant 0 : index
      %14 = vector.load %arg5[%c0_12, %c0_13] : memref<8x2xf32, #tpu.memory_space<vmem>>, vector<8x2xf32>
      %15 = tpu.transpose %14, [1, 0] : vector<8x2xf32> -> vector<2x8xf32>
      %cst_14 = arith.constant dense<0xFF800000> : vector<2xf32>
      %16 = vector.multi_reduction <maximumf>, %15, %cst_14 [1] : vector<2x8xf32> to vector<2xf32>
      %17 = vector.shape_cast %16 : vector<2xf32> to vector<2x1xf32>
      %18 = vector.broadcast %17 : vector<2x1xf32> to vector<2x8xf32>
      %19 = arith.subf %15, %18 : vector<2x8xf32>
      %20 = math.exp %19 : vector<2x8xf32>
      %cst_15 = arith.constant dense<0.000000e+00> : vector<2xf32>
      %21 = vector.multi_reduction <add>, %20, %cst_15 [1] : vector<2x8xf32> to vector<2xf32>
      %22 = vector.shape_cast %21 : vector<2xf32> to vector<2x1xf32>
      %23 = tpu.reciprocal %22 : vector<2x1xf32> -> vector<2x1xf32>
      %24 = vector.broadcast %23 : vector<2x1xf32> to vector<2x8xf32>
      %25 = arith.mulf %20, %24 : vector<2x8xf32>
      %c0_16 = arith.constant 0 : index
      %c0_17 = arith.constant 0 : index
      %26 = vector.load %arg4[%c0_16, %c0_17] : memref<2x8xf32, #tpu.memory_space<vmem>>, vector<2x8xf32>
      tpu.vector_store %arg4[%c0_16, %c0_17], %25 {strides = array<i32>} : memref<2x8xf32, #tpu.memory_space<vmem>>, vector<2x8xf32>,
    } else {
    }
    return
  }
  func.func @transform_0(%arg0: i32, %arg1: i32) -> (i32, i32, i32) {
    %c0_i32 = arith.constant 0 : i32
    %c0_i32_0 = arith.constant 0 : i32
    return %c0_i32, %arg0, %arg1 : i32, i32, i32
  }
  func.func @transform_1(%arg0: i32, %arg1: i32) -> (i32, i32, i32) {
    %c0_i32 = arith.constant 0 : i32
    %c0_i32_0 = arith.constant 0 : i32
    return %c0_i32, %arg0, %arg1 : i32, i32, i32
  }
  func.func @transform_2(%arg0: i32, %arg1: i32) -> (i32, i32) {
    %c0_i32 = arith.constant 0 : i32
    %c0_i32_0 = arith.constant 0 : i32
    return %arg0, %c0_i32 : i32, i32
  }
}

</mosaic_0001>

<llo_original>
// kernel: tpu_custom_call.1
$region0: #{tpu_custom_call.1}
  #allocation0 [shape = 'u32[]', space=smem, size = 0x4, offset = 0x4, fixed_abs, tag = 'smem constant byte address 0x4 - core index']
  #allocation1 [shape = 'u32[144,128]{1,0:T(1,128)}', space=vmem, size = 0x12000, scoped, tag = 'internal scratch']
  #allocation2 [shape = 'f32[8,2]{1,0:T(8,128)}', space=vmem, size = 0x1000, scoped, tag = 'scratch operand']
  %s0 = inlined_call_operand.hbm [shape: f32[1,2,32], index: 0, kind: input, shape index: {}]
  %s1 = inlined_call_operand.hbm [shape: f32[8,2,32], index: 1, kind: input, shape index: {}]
  %s2 = inlined_call_operand.hbm [shape: f32[2,8], index: 2, kind: output, shape index: {}]
  %s3 = sld [smem:[#allocation0]]
  $region34: #{tpu_custom_call.1} parent=0
    _
  %s5 = ssub.s32 1, %s3
  %s6 = scalar_select 0, %s5, %s3
  $region1: #{tpu_custom_call.1} parent=0
    #allocation3 [shape = 'u8[1024]{0}', space=vmem, size = 0x400, scoped, tag = 'input window, operand 0, single buffered']
    #allocation4 [shape = 's32[1]{0}', space=sflag, size = 0x4, scoped, tag = 'scoped memory for tpu_custom_call.1']
    #allocation5 [shape = 's32[1]{0}', space=sflag, size = 0x4, scoped, tag = 'scoped memory for tpu_custom_call.1']
    #allocation6 [shape = 'u8[8192]{0}', space=vmem, size = 0x2000, scoped, tag = 'input window, operand 1, single buffered']
    #allocation7 [shape = 's32[1]{0}', space=sflag, size = 0x4, scoped, tag = 'scoped memory for tpu_custom_call.1']
    #allocation8 [shape = 'u8[1024]{0}', space=vmem, size = 0x400, scoped, tag = 'output window, operand 0, single buffered']
    %7 = vsyncpa [#allocation4], 0
    %8 = vsyncpa [#allocation7], 0
    %9 = vsyncpa [#allocation5], 0
    // Predicated region
    $region2: #{tpu_custom_call.1} parent=1 // pred_check
      _
    $region3: #{tpu_custom_call.1} parent=1 // pred_check_branch
      %11 = sbr.rel (0) target = $region5
    $region4: #{tpu_custom_call.1} parent=1 // pred_region
      %s13 = ssub.s32 32, 32
      %14 = vsyncadd [#allocation4], %s13
      %s16 = sshll.u32 [#allocation3], 4
      %s17 = int_to_ptr.vmem [resolvable:$true] %s16
      %19 = dma.hbm_to_vmem [thread:$0]  %s0, 32, %s17, [#allocation4]
    $region5: #{tpu_custom_call.1} parent=1 // pred_fallthru
      _
    // Predicated region
    $region6: #{tpu_custom_call.1} parent=1 // pred_check
      _
    $region7: #{tpu_custom_call.1} parent=1 // pred_check_branch
      %21 = sbr.rel (0) target = $region9
    $region8: #{tpu_custom_call.1} parent=1 // pred_region
      %s23 = ssub.s32 256, 256
      %24 = vsyncadd [#allocation7], %s23
      %s25 = sshll.u32 [#allocation6], 4
      %s26 = int_to_ptr.vmem [resolvable:$true] %s25
      %31 = dma.hbm_to_vmem [thread:$0]  %s1, 256, %s26, [#allocation7], 32, 32, 2
    $region9: #{tpu_custom_call.1} parent=1 // pred_fallthru
      _
    // Predicated region
    $region10: #{tpu_custom_call.1} parent=1 // pred_check
      _
    $region11: #{tpu_custom_call.1} parent=1 // pred_check_branch
      %33 = sbr.rel (0) target = $region13
    $region12: #{tpu_custom_call.1} parent=1 // pred_region
      %34 = dma.done [#allocation4], 32
    $region13: #{tpu_custom_call.1} parent=1 // pred_fallthru
      _
    // Predicated region
    $region14: #{tpu_custom_call.1} parent=1 // pred_check
      _
    $region15: #{tpu_custom_call.1} parent=1 // pred_check_branch
      %36 = sbr.rel (0) target = $region17
    $region16: #{tpu_custom_call.1} parent=1 // pred_region
      %37 = dma.done [#allocation7], 256
    $region17: #{tpu_custom_call.1} parent=1 // pred_fallthru
      _
    %p38 = scmp.eq.s32.totalorder 0, 0
    // Predicated region
    $region18: #{tpu_custom_call.1} parent=1 // pred_check
      %p39 = pneg %p38
    $region19: #{tpu_custom_call.1} parent=1 // pred_check_branch
      %41 = sbr.rel (%p39) target = $region21
    $region20: #{tpu_custom_call.1} parent=1 // pred_region
      %vm42 = vcmask 15360
      %43 = vst.msk [vmem:[#allocation2] sm:$0xff] %vm42, 0.0
    $region21: #{tpu_custom_call.1} parent=1 // pred_fallthru
      _
    %v44 = vld [vmem:[#allocation3] sm:$0x3]
    %v45 = vld [vmem:[#allocation6] sm:$0x3]
    %v46 = vld [vmem:[#allocation6 + $0x2] sm:$0x3]
    %v47 = vld [vmem:[#allocation6 + $0x4] sm:$0x3]
    %v48 = vld [vmem:[#allocation6 + $0x6] sm:$0x3]
    %v49 = vld [vmem:[#allocation6 + $0x8] sm:$0x3]
    %v50 = vld [vmem:[#allocation6 + $0xa] sm:$0x3]
    %v51 = vld [vmem:[#allocation6 + $0xc] sm:$0x3]
    %v52 = vld [vmem:[#allocation6 + $0xe] sm:$0x3]
    %v53 = vmul.f32 %v44, %v45
    %v54 = vmul.f32 %v44, %v46
    %v55 = vmul.f32 %v44, %v47
    %v56 = vmul.f32 %v44, %v48
    %v57 = vmul.f32 %v44, %v49
    %v58 = vmul.f32 %v44, %v50
    %v59 = vmul.f32 %v44, %v51
    %v60 = vmul.f32 %v44, %v52
    %v61 = vld [vmem:[#allocation2] sm:$0xff]
    %vm62 = vcmask 254976
    %v63 = vsel %vm62, %v53, 0.0
    %64 = vadd.xlane.f32.xlu0 %v63
    %v65 = vpop.xlane.xlu0 %64
    %v66 = vsel %vm62, %v54, 0.0
    %67 = vadd.xlane.f32.xlu0 %v66
    %v68 = vpop.xlane.xlu0 %67
    %v69 = vsel %vm62, %v55, 0.0
    %70 = vadd.xlane.f32.xlu0 %v69
    %v71 = vpop.xlane.xlu0 %70
    %v72 = vsel %vm62, %v56, 0.0
    %73 = vadd.xlane.f32.xlu0 %v72
    %v74 = vpop.xlane.xlu0 %73
    %v75 = vsel %vm62, %v57, 0.0
    %76 = vadd.xlane.f32.xlu0 %v75
    %v77 = vpop.xlane.xlu0 %76
    %v78 = vsel %vm62, %v58, 0.0
    %79 = vadd.xlane.f32.xlu0 %v78
    %v80 = vpop.xlane.xlu0 %79
    %v81 = vsel %vm62, %v59, 0.0
    %82 = vadd.xlane.f32.xlu0 %v81
    %v83 = vpop.xlane.xlu0 %82
    %v84 = vsel %vm62, %v60, 0.0
    %85 = vadd.xlane.f32.xlu0 %v84
    %v86 = vpop.xlane.xlu0 %85
    %v95 = vlaneseq
    %v96 = vand.u32 %v95, 127
    %v97 = vlaneseq
    %v98 = vshrl.u32 %v97, 7
    %v99 = vsub.s32 %v96, %v98
    %v100 = vrot.slane %v65, %v99
    %v101 = vlaneseq
    %v102 = vshrl.u32 %v101, 7
    %v103 = vsub.s32 %v96, %v102
    %v104 = vrot.slane %v68, %v103
    %v105 = vlaneseq
    %v106 = vshrl.u32 %v105, 7
    %v107 = vsub.s32 %v96, %v106
    %v108 = vrot.slane %v71, %v107
    %v109 = vlaneseq
    %v110 = vshrl.u32 %v109, 7
    %v111 = vsub.s32 %v96, %v110
    %v112 = vrot.slane %v74, %v111
    %v113 = vlaneseq
    %v114 = vshrl.u32 %v113, 7
    %v115 = vsub.s32 %v96, %v114
    %v116 = vrot.slane %v77, %v115
    %v117 = vlaneseq
    %v118 = vshrl.u32 %v117, 7
    %v119 = vsub.s32 %v96, %v118
    %v120 = vrot.slane %v80, %v119
    %v121 = vlaneseq
    %v122 = vshrl.u32 %v121, 7
    %v123 = vsub.s32 %v96, %v122
    %v124 = vrot.slane %v83, %v123
    %v125 = vlaneseq
    %v126 = vshrl.u32 %v125, 7
    %v127 = vsub.s32 %v96, %v126
    %v128 = vrot.slane %v86, %v127
    %vm129 = vcmask 1041409
    %v130 = vsel %vm129, %v104, %v100
    %vm131 = vcmask 1042434
    %v132 = vsel %vm131, %v108, %v130
    %vm133 = vcmask 1043459
    %v134 = vsel %vm133, %v112, %v132
    %vm135 = vcmask 1044484
    %v136 = vsel %vm135, %v116, %v134
    %vm137 = vcmask 1045509
    %v138 = vsel %vm137, %v120, %v136
    %vm139 = vcmask 1046534
    %v140 = vsel %vm139, %v124, %v138
    %vm141 = vcmask 1047559
    %v142 = vsel %vm141, %v128, %v140
    %v144 = vadd.f32 %v61, %v142
    %vm145 = vcmask 15360
    %146 = vst.msk [vmem:[#allocation2] sm:$0xff] %vm145, %v144
    // Predicated region
    $region22: #{tpu_custom_call.1} parent=1 // pred_check
      %p147 = pneg %p38
    $region23: #{tpu_custom_call.1} parent=1 // pred_check_branch
      %149 = sbr.rel (%p147) target = $region25
    $region24: #{tpu_custom_call.1} parent=1 // pred_region
      %v150 = vld [vmem:[#allocation2] sm:$0xff]
      %151 = vxpose.xlu0.b32.start [1/16] %v150, 128
      %152 = vxpose.xlu0.b32.cont [2/16] 0.0, 128
      %153 = vxpose.xlu0.b32.cont [3/16] 0.0, 128
      %154 = vxpose.xlu0.b32.cont [4/16] 0.0, 128
      %155 = vxpose.xlu0.b32.cont [5/16] 0.0, 128
      %156 = vxpose.xlu0.b32.cont [6/16] 0.0, 128
      %157 = vxpose.xlu0.b32.cont [7/16] 0.0, 128
      %158 = vxpose.xlu0.b32.cont [8/16] 0.0, 128
      %159 = vxpose.xlu0.b32.cont [9/16] 0.0, 128
      %160 = vxpose.xlu0.b32.cont [10/16] 0.0, 128
      %161 = vxpose.xlu0.b32.cont [11/16] 0.0, 128
      %162 = vxpose.xlu0.b32.cont [12/16] 0.0, 128
      %163 = vxpose.xlu0.b32.cont [13/16] 0.0, 128
      %164 = vxpose.xlu0.b32.cont [14/16] 0.0, 128
      %165 = vxpose.xlu0.b32.cont [15/16] 0.0, 128
      %166 = vxpose.xlu0.b32.end [16/16] 0.0, 128
      %v167 = vpop.trf.xlu0
      %v168 = vpop.trf.xlu0
      %v169 = vpop.trf.xlu0
      %v170 = vpop.trf.xlu0
      %v171 = vpop.trf.xlu0
      %v172 = vpop.trf.xlu0
      %v173 = vpop.trf.xlu0
      %v174 = vpop.trf.xlu0
      %v175 = vpop.trf.xlu0
      %v176 = vpop.trf.xlu0
      %v177 = vpop.trf.xlu0
      %v178 = vpop.trf.xlu0
      %v179 = vpop.trf.xlu0
      %v180 = vpop.trf.xlu0
      %v181 = vpop.trf.xlu0
      %v182 = vpop.trf.xlu0
      %vm183 = vcmask 58368
      %v184 = vsel %vm183, %v167, -inf
      %185 = vmax.xlane.f32.xlu0 %v184
      %v186 = vpop.xlane.xlu0 %185
      %v187 = vsub.f32 %v167, %v186
      %v188 = vmul.f32 %v187, 1.442695
      %v189 = vpow.pop %v188
      %v190 = vsel %vm183, %v189, 0.0
      %191 = vadd.xlane.f32.xlu0 %v190
      %v192 = vpop.xlane.xlu0 %191
      %v193 = vrcp.pop %v192
      %v194 = vmul.f32 %v189, %v193
      %195 = vst.msk [vmem:[#allocation8] sm:$0x3] %vm183, %v194
    $region25: #{tpu_custom_call.1} parent=1 // pred_fallthru
      _
    // Predicated region
    $region26: #{tpu_custom_call.1} parent=1 // pred_check
      _
    $region27: #{tpu_custom_call.1} parent=1 // pred_check_branch
      %197 = sbr.rel (0) target = $region29
    $region28: #{tpu_custom_call.1} parent=1 // pred_region
      %s199 = ssub.s32 32, 32
      %200 = vsyncadd [#allocation5], %s199
      %s202 = sshll.u32 [#allocation8], 4
      %s203 = int_to_ptr.vmem [resolvable:$true] %s202
      %205 = dma.vmem_to_hbm [thread:$0]  %s203, 32, %s2, [#allocation5]
    $region29: #{tpu_custom_call.1} parent=1 // pred_fallthru
      _
    // Predicated region
    $region30: #{tpu_custom_call.1} parent=1 // pred_check
      _
    $region31: #{tpu_custom_call.1} parent=1 // pred_check_branch
      %207 = sbr.rel (0) target = $region33
    $region32: #{tpu_custom_call.1} parent=1 // pred_region
      %208 = dma.done [#allocation5], 32
    $region33: #{tpu_custom_call.1} parent=1 // pred_fallthru
      _
    %209 = vsyncpa [#allocation4], 1
    %210 = vsyncpa [#allocation7], 1
    %211 = vsyncpa [#allocation5], 1

</llo_original>
